<compile_context>
chip_gen: v7x
topology: tpu7x:2x2x1
jax: 0.10.0
libtpu: 0.0.40
codegen_flags: <defaults>
</compile_context>

<pallas_src>
import jax
import jax.numpy as jnp
from jax.experimental import pallas as pl
from jax.experimental.pallas import tpu as pltpu


def _round_up(v, m):
    return ((v + m - 1) // m) * m


def simple_dnn_kernel(xt_ref, w12t_ref, b12t_ref, w3ot_ref, b3ot_ref, out_ref):
    # xt: (D, tm) bf16.  Folded weights bf16, biases f32 column vectors.
    # h^T = W12^T @ x^T + b12^T  -> (H, tm), f32 accumulation on the MXU.
    h = jnp.dot(w12t_ref[...], xt_ref[...],
                preferred_element_type=jnp.float32) + b12t_ref[...]
    h = jnp.maximum(h, 0.0)                       # ReLU (dropout = identity)

    # logits^T = W3o^T @ relu(h)^T + b3o^T  -> (O, tm)
    logits = jnp.dot(w3ot_ref[...], h.astype(w3ot_ref.dtype),
                     preferred_element_type=jnp.float32) + b3ot_ref[...]

    # Stable softmax over the feature axis (original dim=1, here axis 0).
    m = jnp.max(logits, axis=0, keepdims=True)
    e = jnp.exp(logits - m)
    denom = jnp.sum(e, axis=0, keepdims=True)
    out_ref[...] = (e / denom).astype(out_ref.dtype)


def fold_params(params):
    """Fold the two linear pairs (no nonlinearity between them) once, at init.

    Returns transposed, MXU-ready operands:
      w12t: (H, D) bf16,  b12t: (H, 1) f32,
      w3ot: (O, H) bf16,  b3ot: (O, 1) f32.
    """
    (w1, b1), (w2, b2), (w3, b3), (wo, bo) = params
    w12 = w1 @ w2                 # (D, H)
    b12 = b1 @ w2 + b2            # (1, H)
    w3o = w3 @ wo                 # (H, O)
    b3o = b3 @ wo + bo            # (1, O)
    return {
        "w12t": jnp.asarray(w12.T, jnp.bfloat16),
        "b12t": jnp.asarray(b12.T, jnp.float32),
        "w3ot": jnp.asarray(w3o.T, jnp.bfloat16),
        "b3ot": jnp.asarray(b3o.T, jnp.float32),
    }


def simple_dnn_forward(x, folded, *, tm_max=32768):
    N, D = x.shape
    H = folded["w12t"].shape[0]
    O = folded["w3ot"].shape[0]

    # Batch tile: lane axis of every block, so keep it a multiple of 128.
    # Aim for >= ~4 grid steps at large N (v7x megacore sharding), cap at
    # tm_max so double-buffered x/out blocks + f32 intermediates stay within
    # the scoped-VMEM budget on all of v5e / v6e / v7x.
    tm = max(128, min(tm_max, _round_up(pl.cdiv(N, 4), 128)))
    n_pad = pl.cdiv(N, tm) * tm

    # Single fused wrapper pass over x: transpose to (D, N), cast to bf16,
    # pad the batch axis up to n_pad.
    x_t = jnp.pad(x.T.astype(jnp.bfloat16), ((0, 0), (0, n_pad - N)))

    grid_spec = pl.GridSpec(
        grid=(n_pad // tm,),
        in_specs=[
            pl.BlockSpec((D, tm), lambda i: (0, i)),              # x^T tile (pipelined)
            pl.BlockSpec(folded["w12t"].shape, lambda i: (0, 0)),  # resident weights
            pl.BlockSpec(folded["b12t"].shape, lambda i: (0, 0)),
            pl.BlockSpec(folded["w3ot"].shape, lambda i: (0, 0)),
            pl.BlockSpec(folded["b3ot"].shape, lambda i: (0, 0)),
        ],
        out_specs=pl.BlockSpec((O, tm), lambda i: (0, i)),
    )

    cost = pl.CostEstimate(
        flops=2 * n_pad * (D * H + H * O),
        transcendentals=n_pad * O,
        bytes_accessed=n_pad * (2 * D + 4 * O)
        + 2 * (D * H + H * O) + 4 * (H + O),
    )

    out_t = pl.pallas_call(
        simple_dnn_kernel,
        out_shape=jax.ShapeDtypeStruct((O, n_pad), jnp.float32),
        grid_spec=grid_spec,
        compiler_params=pltpu.CompilerParams(
            dimension_semantics=("parallel",),
            vmem_limit_bytes=32 * 1024 * 1024,
        ),
        cost_estimate=cost,
    )(x_t, folded["w12t"], folded["b12t"], folded["w3ot"], folded["b3ot"])

    # (O, n_pad) -> (N, O); padded batch columns (softmax of the bias) dropped.
    return out_t[:, :N].T


def init_linear(key, fan_in, fan_out):
    # Deterministic init mimicking PyTorch nn.Linear default:
    # U(-1/sqrt(fan_in), 1/sqrt(fan_in)) for both weight and bias.
    kw, kb = jax.random.split(key)
    bound = 1.0 / jnp.sqrt(jnp.float32(fan_in))
    w = jax.random.uniform(kw, (fan_in, fan_out), jnp.float32, -bound, bound)
    b = jax.random.uniform(kb, (1, fan_out), jnp.float32, -bound, bound)
    return w, b


if __name__ == "__main__":
    # Small shapes consistent with the module.
    batch = 8
    input_dim = 16
    hidden_dim = 32
    layer_dim = 32
    output_dim = 4
    # l2_drop_rate would parameterize nn.Dropout; identity at inference.
    # TODO(synk): BatchNorm1d layers exist in __init__ but are unused in
    # forward(), so they are intentionally not implemented.

    key = jax.random.PRNGKey(0)
    kx, k1, k2, k3, ko = jax.random.split(key, 5)

    x = jax.random.normal(kx, (batch, input_dim), jnp.float32)

    params = (
        init_linear(k1, input_dim, hidden_dim),
        init_linear(k2, hidden_dim, layer_dim),
        init_linear(k3, layer_dim, layer_dim // 2),
        init_linear(ko, layer_dim // 2, output_dim),
    )
    folded = fold_params(params)   # hoisted out of the per-call path

    out = simple_dnn_forward(x, folded)
    out = jax.block_until_ready(out)

    # Sanity: shape and exact softmax normalization.
    assert out.shape == (batch, output_dim)
    assert jnp.allclose(jnp.sum(out, axis=1), 1.0, atol=1e-3)

    # Cross-check against an unfused f32 pure-JAX reference of the same
    # forward. Tolerance loosened for bf16 MXU operands / folded weights.
    def ref(x, params):
        (w1, b1), (w2, b2), (w3, b3), (wo, bo) = params
        h = x @ w1 + b1
        h = jnp.maximum(h @ w2 + b2, 0.0)
        h = h @ w3 + b3
        logits = h @ wo + bo
        return jax.nn.softmax(logits, axis=1)

    assert jnp.allclose(out, ref(x, params), atol=2e-2, rtol=2e-2)

    print("KERNEL_OK")
</pallas_src>

<mosaic_0001>
module attributes {stable_mosaic.version = 11 : i64} {
  func.func @simple_dnn_kernel(%arg0: i32, %arg1: memref<16x128xbf16, #tpu.memory_space<vmem>>, %arg2: memref<32x16xbf16, #tpu.memory_space<vmem>>, %arg3: memref<32x1xf32, #tpu.memory_space<vmem>>, %arg4: memref<4x32xbf16, #tpu.memory_space<vmem>>, %arg5: memref<4x1xf32, #tpu.memory_space<vmem>>, %arg6: memref<4x128xf32, #tpu.memory_space<vmem>>) attributes {dimension_semantics = [#tpu.dimension_semantics<parallel>], iteration_bounds = array<i64: 1>, scalar_prefetch = 0 : i64, scratch_operands = 0 : i64, tpu.core_type = #tpu.core_type<tc>, window_params = [{transform_indices = @transform_0, window_bounds = array<i64: 16, 128>}, {pipeline_mode = #tpu.pipeline_mode<synchronous>, transform_indices = @transform_1, window_bounds = array<i64: 32, 16>}, {pipeline_mode = #tpu.pipeline_mode<synchronous>, transform_indices = @transform_2, window_bounds = array<i64: 32, 1>}, {pipeline_mode = #tpu.pipeline_mode<synchronous>, transform_indices = @transform_3, window_bounds = array<i64: 4, 32>}, {pipeline_mode = #tpu.pipeline_mode<synchronous>, transform_indices = @transform_4, window_bounds = array<i64: 4, 1>}, {transform_indices = @transform_5, window_bounds = array<i64: 4, 128>}]} {
    %c0 = arith.constant 0 : index
    %c0_0 = arith.constant 0 : index
    %0 = vector.load %arg2[%c0, %c0_0] : memref<32x16xbf16, #tpu.memory_space<vmem>>, vector<32x16xbf16>
    %c0_1 = arith.constant 0 : index
    %c0_2 = arith.constant 0 : index
    %1 = vector.load %arg1[%c0_1, %c0_2] : memref<16x128xbf16, #tpu.memory_space<vmem>>, vector<16x128xbf16>
    %cst = arith.constant dense<0.000000e+00> : vector<32x128xf32>
    %2 = tpu.matmul %0, %1, %cst {dimension_numbers = #tpu.dot_dimension_numbers<[1], [0], [0], [1], [0, 0, 1, 1], [], []>} : vector<32x16xbf16>, vector<16x128xbf16>, vector<32x128xf32> -> vector<32x128xf32>
    %c0_3 = arith.constant 0 : index
    %c0_4 = arith.constant 0 : index
    %3 = vector.load %arg3[%c0_3, %c0_4] : memref<32x1xf32, #tpu.memory_space<vmem>>, vector<32x1xf32>
    %4 = vector.broadcast %3 : vector<32x1xf32> to vector<32x128xf32>
    %5 = arith.addf %2, %4 : vector<32x128xf32>
    %cst_5 = arith.constant 0.000000e+00 : f32
    %6 = vector.broadcast %cst_5 : f32 to vector<32x128xf32>
    %7 = arith.maximumf %5, %6 : vector<32x128xf32>
    %c0_6 = arith.constant 0 : index
    %c0_7 = arith.constant 0 : index
    %8 = vector.load %arg4[%c0_6, %c0_7] : memref<4x32xbf16, #tpu.memory_space<vmem>>, vector<4x32xbf16>
    %9 = arith.truncf %7 : vector<32x128xf32> to vector<32x128xbf16>
    %cst_8 = arith.constant dense<0.000000e+00> : vector<4x128xf32>
    %10 = tpu.matmul %8, %9, %cst_8 {dimension_numbers = #tpu.dot_dimension_numbers<[1], [0], [0], [1], [0, 0, 1, 1], [], []>} : vector<4x32xbf16>, vector<32x128xbf16>, vector<4x128xf32> -> vector<4x128xf32>
    %c0_9 = arith.constant 0 : index
    %c0_10 = arith.constant 0 : index
    %11 = vector.load %arg5[%c0_9, %c0_10] : memref<4x1xf32, #tpu.memory_space<vmem>>, vector<4x1xf32>
    %12 = vector.broadcast %11 : vector<4x1xf32> to vector<4x128xf32>
    %13 = arith.addf %10, %12 : vector<4x128xf32>
    %cst_11 = arith.constant dense<0xFF800000> : vector<128xf32>
    %14 = vector.multi_reduction <maximumf>, %13, %cst_11 [0] : vector<4x128xf32> to vector<128xf32>
    %15 = vector.shape_cast %14 : vector<128xf32> to vector<1x128xf32>
    %16 = vector.broadcast %15 : vector<1x128xf32> to vector<4x128xf32>
    %17 = arith.subf %13, %16 : vector<4x128xf32>
    %18 = math.exp %17 : vector<4x128xf32>
    %cst_12 = arith.constant dense<0.000000e+00> : vector<128xf32>
    %19 = vector.multi_reduction <add>, %18, %cst_12 [0] : vector<4x128xf32> to vector<128xf32>
    %20 = vector.shape_cast %19 : vector<128xf32> to vector<1x128xf32>
    %21 = vector.broadcast %20 : vector<1x128xf32> to vector<4x128xf32>
    %22 = arith.divf %18, %21 : vector<4x128xf32>
    %c0_13 = arith.constant 0 : index
    %c0_14 = arith.constant 0 : index
    %23 = vector.load %arg6[%c0_13, %c0_14] : memref<4x128xf32, #tpu.memory_space<vmem>>, vector<4x128xf32>
    tpu.vector_store %arg6[%c0_13, %c0_14], %22 {strides = array<i32>} : memref<4x128xf32, #tpu.memory_space<vmem>>, vector<4x128xf32>,
    return
  }
  func.func @transform_0(%arg0: i32) -> (i32, i32) {
    %c0_i32 = arith.constant 0 : i32
    %c0_i32_0 = arith.constant 0 : i32
    return %c0_i32, %arg0 : i32, i32
  }
  func.func @transform_1(%arg0: i32) -> (i32, i32) {
    %c0_i32 = arith.constant 0 : i32
    %c0_i32_0 = arith.constant 0 : i32
    %c0_i32_1 = arith.constant 0 : i32
    return %c0_i32, %c0_i32_0 : i32, i32
  }
  func.func @transform_2(%arg0: i32) -> (i32, i32) {
    %c0_i32 = arith.constant 0 : i32
    %c0_i32_0 = arith.constant 0 : i32
    %c0_i32_1 = arith.constant 0 : i32
    return %c0_i32, %c0_i32_0 : i32, i32
  }
  func.func @transform_3(%arg0: i32) -> (i32, i32) {
    %c0_i32 = arith.constant 0 : i32
    %c0_i32_0 = arith.constant 0 : i32
    %c0_i32_1 = arith.constant 0 : i32
    return %c0_i32, %c0_i32_0 : i32, i32
  }
  func.func @transform_4(%arg0: i32) -> (i32, i32) {
    %c0_i32 = arith.constant 0 : i32
    %c0_i32_0 = arith.constant 0 : i32
    %c0_i32_1 = arith.constant 0 : i32
    return %c0_i32, %c0_i32_0 : i32, i32
  }
  func.func @transform_5(%arg0: i32) -> (i32, i32) {
    %c0_i32 = arith.constant 0 : i32
    %c0_i32_0 = arith.constant 0 : i32
    return %c0_i32, %arg0 : i32, i32
  }
}

</mosaic_0001>

<llo_original>
// kernel: tpu_custom_call.1
$region0: #{tpu_custom_call.1}
  #allocation0 [shape = 'u32[]', space=smem, size = 0x4, offset = 0x4, fixed_abs, tag = 'smem constant byte address 0x4 - core index']
  #allocation1 [shape = 'u32[144,128]{1,0:T(1,128)}', space=vmem, size = 0x12000, scoped, tag = 'internal scratch']
  %s0 = inlined_call_operand.vmem [shape: bf16[16,128], index: 0, kind: input, shape index: {}]
  %s1 = inlined_call_operand.vmem [shape: bf16[32,16], index: 1, kind: input, shape index: {}]
  %s2 = inlined_call_operand.vmem [shape: f32[32,1], index: 2, kind: input, shape index: {}]
  %s3 = inlined_call_operand.vmem [shape: bf16[4,32], index: 3, kind: input, shape index: {}]
  %s4 = inlined_call_operand.vmem [shape: f32[4,1], index: 4, kind: input, shape index: {}]
  %s5 = inlined_call_operand.hbm [shape: f32[4,128], index: 5, kind: output, shape index: {}]
  %s6 = sld [smem:[#allocation0]]
  $region30: #{tpu_custom_call.1} parent=0
    _
  %s8 = ssub.s32 1, %s6
  %s9 = scalar_select 0, %s8, %s6
  $region1: #{tpu_custom_call.1} parent=0
    #allocation2 [shape = 'u8[2048]{0}', space=vmem, size = 0x800, scoped, tag = 'output window, operand 0, single buffered']
    #allocation3 [shape = 's32[1]{0}', space=sflag, size = 0x4, scoped, tag = 'scoped memory for tpu_custom_call.1']
    %10 = vsyncpa [#allocation3], 0
    // Predicated region
    $region2: #{tpu_custom_call.1} parent=1 // pred_check
      _
    $region3: #{tpu_custom_call.1} parent=1 // pred_check_branch
      %12 = sbr.rel (0) target = $region5
    $region4: #{tpu_custom_call.1} parent=1 // pred_region
      _
    $region5: #{tpu_custom_call.1} parent=1 // pred_fallthru
      _
    // Predicated region
    $region6: #{tpu_custom_call.1} parent=1 // pred_check
      _
    $region7: #{tpu_custom_call.1} parent=1 // pred_check_branch
      %14 = sbr.rel (0) target = $region9
    $region8: #{tpu_custom_call.1} parent=1 // pred_region
      _
    $region9: #{tpu_custom_call.1} parent=1 // pred_fallthru
      _
    // Predicated region
    $region10: #{tpu_custom_call.1} parent=1 // pred_check
      _
    $region11: #{tpu_custom_call.1} parent=1 // pred_check_branch
      %16 = sbr.rel (0) target = $region13
    $region12: #{tpu_custom_call.1} parent=1 // pred_region
      _
    $region13: #{tpu_custom_call.1} parent=1 // pred_fallthru
      _
    // Predicated region
    $region14: #{tpu_custom_call.1} parent=1 // pred_check
      _
    $region15: #{tpu_custom_call.1} parent=1 // pred_check_branch
      %18 = sbr.rel (0) target = $region17
    $region16: #{tpu_custom_call.1} parent=1 // pred_region
      _
    $region17: #{tpu_custom_call.1} parent=1 // pred_fallthru
      _
    // Predicated region
    $region18: #{tpu_custom_call.1} parent=1 // pred_check
      _
    $region19: #{tpu_custom_call.1} parent=1 // pred_check_branch
      %20 = sbr.rel (0) target = $region21
    $region20: #{tpu_custom_call.1} parent=1 // pred_region
      _
    $region21: #{tpu_custom_call.1} parent=1 // pred_fallthru
      _
    %v22 = vld [vmem:[%s1] sm:$0xf]
    %v23 = vld [vmem:[%s1 + $0x4] sm:$0xf]
    %v24 = vld [vmem:[%s1 + $0x8] sm:$0xf]
    %v25 = vld [vmem:[%s1 + $0xc] sm:$0xf]
    %v26 = vld [vmem:[%s0] sm:$0xf]
    %v27 = vld [vmem:[%s0 + $0x4] sm:$0xf]
    %v28 = vld [vmem:[%s2] sm:$0xff]
    %v29 = vld [vmem:[%s2 + $0x8] sm:$0xff]
    %v30 = vld [vmem:[%s2 + $0x10] sm:$0xff]
    %v31 = vld [vmem:[%s2 + $0x18] sm:$0xff]
    %33 = vset.pattern.permute.xlu0 0
    %34 = vperm.xlu0 %33, %v28
    %v35 = vpop.permute.xlu0 %34
    %38 = vset.pattern.permute.xlu0 0
    %39 = vperm.xlu0 %38, %v29
    %v40 = vpop.permute.xlu0 %39
    %43 = vset.pattern.permute.xlu0 0
    %44 = vperm.xlu0 %43, %v30
    %v45 = vpop.permute.xlu0 %44
    %48 = vset.pattern.permute.xlu0 0
    %49 = vperm.xlu0 %48, %v31
    %v50 = vpop.permute.xlu0 %49
    %v56 = vunpack.c.l.b16 %v22
    %v57 = vunpack.c.l.b16 %v23
    %v58 = vunpack.c.l.b16 %v24
    %v59 = vunpack.c.l.b16 %v25
    %v60 = vpack.c.b16 %v57, %v56
    %v61 = vpack.c.b16 %v59, %v58
    %v64 = vunpack.c.l.b16 %v26
    %v65 = vunpack.c.l.b16 %v27
    %v66 = vpack.c.b16 %v65, %v64
    %vm68 = vcmask 130048
    %v70 = vsel %vm68, %v60, 0
    %v73 = vsel %vm68, %v61, 0
    %75 = vmatprep.subr.bf16.mxu0 0
    %76 = vmatpush1.bf16.msra.mxu0 %v66
    %77 = vmatprep.subr.bf16.mxu0 0
    %78 = vmatpush1.bf16.msra.mxu0 0
    %79 = vmatprep.subr.bf16.mxu0 0
    %80 = vmatpush1.bf16.msra.mxu0 0
    %81 = vmatprep.subr.bf16.mxu0 0
    %82 = vmatpush1.bf16.msra.mxu0 0
    %83 = vmatprep.subr.bf16.mxu0 0
    %84 = vmatpush1.bf16.msra.mxu0 0
    %85 = vmatprep.subr.bf16.mxu0 0
    %86 = vmatpush1.bf16.msra.mxu0 0
    %87 = vmatprep.subr.bf16.mxu0 0
    %88 = vmatpush1.bf16.msra.mxu0 0
    %89 = vmatprep.subr.bf16.mxu0 0
    %90 = vmatpush1.bf16.msra.mxu0 0
    %91 = vmatprep.subr.bf16.mxu0 0
    %92 = vmatpush1.bf16.msra.mxu0 0
    %93 = vmatprep.subr.bf16.mxu0 0
    %94 = vmatpush1.bf16.msra.mxu0 0
    %95 = vmatprep.subr.bf16.mxu0 0
    %96 = vmatpush1.bf16.msra.mxu0 0
    %97 = vmatprep.subr.bf16.mxu0 0
    %98 = vmatpush1.bf16.msra.mxu0 0
    %99 = vmatprep.subr.bf16.mxu0 0
    %100 = vmatpush1.bf16.msra.mxu0 0
    %101 = vmatprep.subr.bf16.mxu0 0
    %102 = vmatpush1.bf16.msra.mxu0 0
    %103 = vmatprep.subr.bf16.mxu0 0
    %104 = vmatpush1.bf16.msra.mxu0 0
    %105 = vmatprep.subr.bf16.mxu0 0
    %106 = vmatpush1.bf16.msra.mxu0 0
    %107 = vmatprep.mubr.bf16.mxu0 0
    %108 = vmatmul.mubr.bf16.gmra.mrb[0].mxu0 %v70
    %v109 = vpop.f32.mrb[0].mxu0
    %v110 = vadd.f32 %v35, %v109
    %v111 = vpop.f32.mrb[0].mxu0
    %v112 = vpop.f32.mrb[0].mxu0
    %v113 = vadd.f32 %v40, %v112
    %v114 = vpop.f32.mrb[0].mxu0
    %115 = vmatprep.mubr.bf16.mxu0 0
    %116 = vmatmul.mubr.bf16.gmra.mrb[0].mxu0 %v73
    %v117 = vpop.f32.mrb[0].mxu0
    %v118 = vadd.f32 %v45, %v117
    %v119 = vpop.f32.mrb[0].mxu0
    %v120 = vpop.f32.mrb[0].mxu0
    %v121 = vadd.f32 %v50, %v120
    %v122 = vpop.f32.mrb[0].mxu0
    %123 = vdwg.mxu0
    %v124 = vmax.f32 %v110, 0.0
    %v125 = vmax.f32 %v113, 0.0
    %v126 = vmax.f32 %v118, 0.0
    %v127 = vmax.f32 %v121, 0.0
    %v128 = vld [vmem:[%s3] sm:$0x3]
    %v129 = vpack.c.bf16 %v125, %v124
    %v130 = vpack.c.bf16 %v127, %v126
    %v131 = vld [vmem:[%s4] sm:$0xf]
    %133 = vset.pattern.permute.xlu0 0
    %134 = vperm.xlu0 %133, %v131
    %v135 = vpop.permute.xlu0 %134
    %vm137 = vcmask 261120
    %v139 = vsel %vm137, %v128, 0
    %141 = vmatprep.subr.bf16.mxu0 0
    %142 = vmatpush1.bf16.msra.mxu0 %v129
    %143 = vmatprep.subr.bf16.mxu0 0
    %144 = vmatpush1.bf16.msra.mxu0 %v130
    %145 = vmatprep.subr.bf16.mxu0 0
    %146 = vmatpush1.bf16.msra.mxu0 0
    %147 = vmatprep.subr.bf16.mxu0 0
    %148 = vmatpush1.bf16.msra.mxu0 0
    %149 = vmatprep.subr.bf16.mxu0 0
    %150 = vmatpush1.bf16.msra.mxu0 0
    %151 = vmatprep.subr.bf16.mxu0 0
    %152 = vmatpush1.bf16.msra.mxu0 0
    %153 = vmatprep.subr.bf16.mxu0 0
    %154 = vmatpush1.bf16.msra.mxu0 0
    %155 = vmatprep.subr.bf16.mxu0 0
    %156 = vmatpush1.bf16.msra.mxu0 0
    %157 = vmatprep.subr.bf16.mxu0 0
    %158 = vmatpush1.bf16.msra.mxu0 0
    %159 = vmatprep.subr.bf16.mxu0 0
    %160 = vmatpush1.bf16.msra.mxu0 0
    %161 = vmatprep.subr.bf16.mxu0 0
    %162 = vmatpush1.bf16.msra.mxu0 0
    %163 = vmatprep.subr.bf16.mxu0 0
    %164 = vmatpush1.bf16.msra.mxu0 0
    %165 = vmatprep.subr.bf16.mxu0 0
    %166 = vmatpush1.bf16.msra.mxu0 0
    %167 = vmatprep.subr.bf16.mxu0 0
    %168 = vmatpush1.bf16.msra.mxu0 0
    %169 = vmatprep.subr.bf16.mxu0 0
    %170 = vmatpush1.bf16.msra.mxu0 0
    %171 = vmatprep.subr.bf16.mxu0 0
    %172 = vmatpush1.bf16.msra.mxu0 0
    %173 = vmatprep.mubr.bf16.mxu0 0
    %174 = vmatmul.mubr.bf16.gmra.mrb[0].mxu0 %v139
    %v175 = vpop.f32.mrb[0].mxu0
    %v176 = vadd.f32 %v135, %v175
    %v177 = vpop.f32.mrb[0].mxu0
    %v178 = vpop.f32.mrb[0].mxu0
    %v179 = vpop.f32.mrb[0].mxu0
    %180 = vdwg.mxu0
    %vm181 = vcmask 1043456
    %v182 = vsel %vm181, %v176, -inf
    %v183 = vrot.slane %v182, 4
    %v184 = vmax.f32 %v182, %v183
    %v185 = vrot.slane %v184, 2
    %v186 = vmax.f32 %v184, %v185
    %v187 = vrot.slane %v186, 1
    %v188 = vmax.f32 %v186, %v187
    %v189 = vsub.f32 %v176, %v188
    %v190 = vmul.f32 %v189, 1.442695
    %v191 = vpow.pop %v190
    %v192 = vsel %vm181, %v191, 0.0
    %v193 = vrot.slane %v192, 4
    %v194 = vadd.f32 %v192, %v193
    %v195 = vrot.slane %v194, 2
    %v196 = vadd.f32 %v194, %v195
    %v197 = vrot.slane %v196, 1
    %v198 = vadd.f32 %v196, %v197
    %v199 = vrcp.pop %v198
    %v200 = vmul.f32 %v191, %v199
    %201 = vst [vmem:[#allocation2] sm:$0xf] %v200
    // Predicated region
    $region22: #{tpu_custom_call.1} parent=1 // pred_check
      _
    $region23: #{tpu_custom_call.1} parent=1 // pred_check_branch
      %203 = sbr.rel (0) target = $region25
    $region24: #{tpu_custom_call.1} parent=1 // pred_region
      %s205 = ssub.s32 64, 64
      %206 = vsyncadd [#allocation3], %s205
      %s208 = sshll.u32 [#allocation2], 4
      %s209 = int_to_ptr.vmem [resolvable:$true] %s208
      %211 = dma.vmem_to_hbm [thread:$0]  %s209, 64, %s5, [#allocation3]
    $region25: #{tpu_custom_call.1} parent=1 // pred_fallthru
      _
    // Predicated region
    $region26: #{tpu_custom_call.1} parent=1 // pred_check
      _
    $region27: #{tpu_custom_call.1} parent=1 // pred_check_branch
      %213 = sbr.rel (0) target = $region29
    $region28: #{tpu_custom_call.1} parent=1 // pred_region
      %214 = dma.done [#allocation3], 64
    $region29: #{tpu_custom_call.1} parent=1 // pred_fallthru
      _
    %215 = vsyncpa [#allocation3], 1

</llo_original>
